<compile_context>
chip_gen: v5e
topology: v5e:2x2
jax: 0.10.0
libtpu: 0.0.40
codegen_flags: <defaults>
</compile_context>

<pallas_src>
import math

import jax
import jax.numpy as jnp
from jax.experimental import pallas as pl
from jax.experimental.pallas import tpu as pltpu

_LANE = 128


def _round_up(n, m):
    return ((n + m - 1) // m) * m


def _lora_kernel(alpha_ref, x_ref, a_ref, b_ref, o_ref, xa_ref):
    # Compute the low-rank intermediate once per batch tile (inner out-dim axis
    # index j == 0), scale by alpha there (tile_m x rank elements, not
    # tile_m x out_dim), and cache it in VMEM scratch for all out_dim tiles.
    @pl.when(pl.program_id(1) == 0)
    def _():
        xa = jnp.dot(x_ref[...], a_ref[...], preferred_element_type=jnp.float32)
        xa_ref[...] = (alpha_ref[0] * xa).astype(xa_ref.dtype)

    # Wide matmul against the current out_dim tile of B; f32 accumulation.
    o_ref[...] = jnp.dot(
        xa_ref[...], b_ref[...], preferred_element_type=jnp.float32
    ).astype(o_ref.dtype)


def lora_forward(x, A, B, alpha, *, tile_m=None, tile_n=None,
                 vmem_budget_bytes=32 * 1024 * 1024):
    """alpha * (x @ A @ B) via a single fused, tiled Pallas kernel.

    x: [..., in_dim], A: [in_dim, rank], B: [rank, out_dim].
    Tiles over batch (pipelined, "parallel") and out_dim ("arbitrary",
    lane-dense); A stays fully resident, the x@A intermediate lives in a VMEM
    scratch reused across out_dim tiles.
    """
    *lead, in_dim = x.shape
    in_dim_a, rank = A.shape
    rank_b, out_dim = B.shape
    assert in_dim == in_dim_a and rank == rank_b

    x2 = x.reshape(-1, in_dim)
    batch = x2.shape[0]

    out_dtype = x.dtype
    x_bytes = jnp.dtype(x.dtype).itemsize
    a_bytes = jnp.dtype(A.dtype).itemsize
    b_bytes = jnp.dtype(B.dtype).itemsize
    o_bytes = jnp.dtype(out_dtype).itemsize

    # Run the wide matmul in B's dtype when B is narrow (bf16/f16); f32 accum.
    xa_dtype = B.dtype if b_bytes < 4 else jnp.float32
    xa_bytes = jnp.dtype(xa_dtype).itemsize

    # ---- out_dim tiling: lane-dense (multiple of 128), wide blocks ------------
    if tile_n is None:
        tile_n = 2048 if o_bytes < 4 else 1024
    if out_dim <= tile_n:
        tile_n = out_dim                      # full-extent block is always legal
        padded_out = out_dim
    else:
        tile_n = max(_LANE, (tile_n // _LANE) * _LANE)
        padded_out = _round_up(out_dim, tile_n)

    # ---- batch tiling: rows sized to the VMEM budget --------------------------
    if tile_m is None:
        # Double-buffered x tile + out tile dominate VMEM (A, B, xa are small).
        per_row = 2 * (in_dim * x_bytes + tile_n * o_bytes) + rank * xa_bytes
        tile_m = vmem_budget_bytes // max(per_row, 1)
        if tile_m >= 256:
            tile_m = min((tile_m // 256) * 256, 2048)
        else:
            # Very wide in_dim: fall back to a small, sublane-aligned tile so
            # the double-buffered x tile still fits in VMEM.
            tile_m = max(8, (tile_m // 8) * 8)
    if batch <= tile_m:
        tile_m = batch                        # full-extent block is always legal
        padded_batch = batch
    else:
        padded_batch = _round_up(batch, tile_m)

    # ---- zero-pad ragged dims (zero rows/cols produce zeros, sliced away) -----
    x_p = x2 if padded_batch == batch else jnp.pad(
        x2, ((0, padded_batch - batch), (0, 0)))
    B_p = B if padded_out == out_dim else jnp.pad(
        B, ((0, 0), (0, padded_out - out_dim)))

    grid = (padded_batch // tile_m, padded_out // tile_n)

    # ---- VMEM limit derived from the tile footprint (double-buffered) ---------
    vmem_need = (2 * tile_m * in_dim * x_bytes          # x tiles
                 + 2 * tile_m * tile_n * o_bytes        # out tiles
                 + 2 * in_dim * rank * a_bytes          # A
                 + 2 * rank * tile_n * b_bytes          # B tiles
                 + tile_m * rank * xa_bytes)            # xa scratch
    vmem_limit = int(min(max(32 << 20, int(1.5 * vmem_need) + (2 << 20)),
                         64 << 20))

    cost = pl.CostEstimate(
        flops=2 * batch * rank * (in_dim + out_dim),
        transcendentals=0,
        bytes_accessed=(x2.size * x_bytes + A.size * a_bytes + B.size * b_bytes
                        + batch * out_dim * o_bytes),
    )

    alpha_arr = jnp.asarray([alpha], dtype=jnp.float32)

    out = pl.pallas_call(
        _lora_kernel,
        out_shape=jax.ShapeDtypeStruct((padded_batch, padded_out), out_dtype),
        grid_spec=pltpu.PrefetchScalarGridSpec(
            num_scalar_prefetch=0,
            grid=grid,
            in_specs=[
                pl.BlockSpec(memory_space=pltpu.MemorySpace.SMEM),       # alpha
                pl.BlockSpec((tile_m, in_dim), lambda i, j: (i, 0)),     # x tile
                pl.BlockSpec((in_dim, rank), lambda i, j: (0, 0)),       # A (resident)
                pl.BlockSpec((rank, tile_n), lambda i, j: (0, j)),       # B out-tile
            ],
            out_specs=pl.BlockSpec((tile_m, tile_n), lambda i, j: (i, j)),
            scratch_shapes=[pltpu.VMEM((tile_m, rank), xa_dtype)],       # xa cache
        ),
        compiler_params=pltpu.CompilerParams(
            dimension_semantics=("parallel", "arbitrary"),
            vmem_limit_bytes=vmem_limit,
        ),
        cost_estimate=cost,
    )(alpha_arr, x_p, A, B_p)

    if padded_batch != batch or padded_out != out_dim:
        out = out[:batch, :out_dim]
    return out.reshape(*lead, out_dim)


def kaiming_uniform(key, shape, a=math.sqrt(5), dtype=jnp.float32):
    """Deterministic stand-in for torch.nn.init.kaiming_uniform_ (fan_in mode)."""
    fan_in = shape[0]
    gain = math.sqrt(2.0 / (1.0 + a * a))
    bound = gain * math.sqrt(3.0 / fan_in)
    return jax.random.uniform(key, shape, dtype=dtype, minval=-bound, maxval=bound)


if __name__ == "__main__":
    # Small shapes consistent with the module's forward: x @ A @ B.
    batch, in_dim, rank, out_dim = 8, 32, 8, 128
    alpha = 2.0

    key = jax.random.PRNGKey(0)
    kx, ka, kb, kx2, kb2, kx3 = jax.random.split(key, 6)

    x = jax.random.normal(kx, (batch, in_dim), dtype=jnp.float32)

    # Parameters per LoRALayer.__init__: A ~ kaiming_uniform, B = zeros.
    A = kaiming_uniform(ka, (in_dim, rank))
    B = jnp.zeros((rank, out_dim), dtype=jnp.float32)

    out = jax.block_until_ready(lora_forward(x, A, B, alpha))
    ref = alpha * (x @ A @ B)
    assert out.shape == (batch, out_dim)
    assert jnp.allclose(out, ref, atol=1e-5), "mismatch vs reference (zero-B init)"

    # Nonzero B so the fused matmul path is actually exercised.
    B_test = kaiming_uniform(kb, (rank, out_dim))
    out2 = jax.block_until_ready(lora_forward(x, A, B_test, alpha))
    ref2 = alpha * (x @ A @ B_test)
    assert jnp.allclose(out2, ref2, atol=1e-4, rtol=1e-4), "mismatch vs reference"

    # Ragged batch + multi-tile out_dim: exercises padding, the xa scratch reuse
    # across out_dim tiles (pl.when(j == 0)), and multi-step pipelining.
    batch3, out_dim3 = 10, 200
    x3 = jax.random.normal(kx2, (batch3, in_dim), dtype=jnp.float32)
    B3 = kaiming_uniform(kb2, (rank, out_dim3))
    out3 = jax.block_until_ready(
        lora_forward(x3, A, B3, alpha, tile_m=8, tile_n=128))
    ref3 = alpha * (x3 @ A @ B3)
    assert out3.shape == (batch3, out_dim3)
    assert jnp.allclose(out3, ref3, atol=1e-4, rtol=1e-4), "mismatch (tiled path)"

    # N-D input (leading dims flattened into the batch), like torch's matmul.
    x4 = jax.random.normal(kx3, (2, 5, in_dim), dtype=jnp.float32)
    out4 = jax.block_until_ready(lora_forward(x4, A, B_test, alpha))
    ref4 = alpha * (x4 @ A @ B_test)
    assert out4.shape == (2, 5, out_dim)
    assert jnp.allclose(out4, ref4, atol=1e-4, rtol=1e-4), "mismatch (3-D input)"

    print("KERNEL_OK")
</pallas_src>

<mosaic_0001>
module attributes {stable_mosaic.version = 11 : i64} {
  func.func @_lora_kernel(%arg0: i32, %arg1: i32, %arg2: memref<1xf32, #tpu.memory_space<smem>>, %arg3: memref<8x32xf32, #tpu.memory_space<vmem>>, %arg4: memref<32x8xf32, #tpu.memory_space<vmem>>, %arg5: memref<8x128xf32, #tpu.memory_space<vmem>>, %arg6: memref<8x128xf32, #tpu.memory_space<vmem>>, %arg7: memref<8x8xf32, #tpu.memory_space<vmem>>) attributes {dimension_semantics = [#tpu.dimension_semantics<parallel>, #tpu.dimension_semantics<arbitrary>], iteration_bounds = array<i64: 1, 1>, scalar_prefetch = 0 : i64, scratch_operands = 1 : i64, tpu.core_type = #tpu.core_type<tc>, window_params = [{transform_indices = @transform_0, window_bounds = array<i64: 1>}, {transform_indices = @transform_1, window_bounds = array<i64: 8, 32>}, {pipeline_mode = #tpu.pipeline_mode<synchronous>, transform_indices = @transform_2, window_bounds = array<i64: 32, 8>}, {transform_indices = @transform_3, window_bounds = array<i64: 8, 128>}, {transform_indices = @transform_4, window_bounds = array<i64: 8, 128>}]} {
    %c0_i32 = arith.constant 0 : i32
    %0 = arith.cmpi eq, %arg1, %c0_i32 : i32
    %1 = arith.extui %0 : i1 to i32
    %c0_i32_0 = arith.constant 0 : i32
    %2 = arith.cmpi ne, %1, %c0_i32_0 : i32
    scf.if %2 {
      %c0_6 = arith.constant 0 : index
      %c0_7 = arith.constant 0 : index
      %7 = vector.load %arg3[%c0_6, %c0_7] : memref<8x32xf32, #tpu.memory_space<vmem>>, vector<8x32xf32>
      %c0_8 = arith.constant 0 : index
      %c0_9 = arith.constant 0 : index
      %8 = vector.load %arg4[%c0_8, %c0_9] : memref<32x8xf32, #tpu.memory_space<vmem>>, vector<32x8xf32>
      %cst_10 = arith.constant dense<0.000000e+00> : vector<8x8xf32>
      %9 = tpu.matmul %7, %8, %cst_10 {dimension_numbers = #tpu.dot_dimension_numbers<[1], [0], [0], [1], [0, 0, 1, 1], [], []>} : vector<8x32xf32>, vector<32x8xf32>, vector<8x8xf32> -> vector<8x8xf32>
      %c0_11 = arith.constant 0 : index
      %10 = memref.load %arg2[%c0_11] : memref<1xf32, #tpu.memory_space<smem>>
      %11 = vector.broadcast %10 : f32 to vector<8x8xf32>
      %12 = arith.mulf %11, %9 : vector<8x8xf32>
      %c0_12 = arith.constant 0 : index
      %c0_13 = arith.constant 0 : index
      %13 = vector.load %arg7[%c0_12, %c0_13] : memref<8x8xf32, #tpu.memory_space<vmem>>, vector<8x8xf32>
      tpu.vector_store %arg7[%c0_12, %c0_13], %12 {strides = array<i32>} : memref<8x8xf32, #tpu.memory_space<vmem>>, vector<8x8xf32>,
    } else {
    }
    %c0 = arith.constant 0 : index
    %c0_1 = arith.constant 0 : index
    %3 = vector.load %arg7[%c0, %c0_1] : memref<8x8xf32, #tpu.memory_space<vmem>>, vector<8x8xf32>
    %c0_2 = arith.constant 0 : index
    %c0_3 = arith.constant 0 : index
    %4 = vector.load %arg5[%c0_2, %c0_3] : memref<8x128xf32, #tpu.memory_space<vmem>>, vector<8x128xf32>
    %cst = arith.constant dense<0.000000e+00> : vector<8x128xf32>
    %5 = tpu.matmul %3, %4, %cst {dimension_numbers = #tpu.dot_dimension_numbers<[1], [0], [0], [1], [0, 0, 1, 1], [], []>} : vector<8x8xf32>, vector<8x128xf32>, vector<8x128xf32> -> vector<8x128xf32>
    %c0_4 = arith.constant 0 : index
    %c0_5 = arith.constant 0 : index
    %6 = vector.load %arg6[%c0_4, %c0_5] : memref<8x128xf32, #tpu.memory_space<vmem>>, vector<8x128xf32>
    tpu.vector_store %arg6[%c0_4, %c0_5], %5 {strides = array<i32>} : memref<8x128xf32, #tpu.memory_space<vmem>>, vector<8x128xf32>,
    return
  }
  func.func @transform_0(%arg0: i32, %arg1: i32) -> i32 {
    %c0_i32 = arith.constant 0 : i32
    %c0_i32_0 = arith.constant 0 : i32
    return %c0_i32 : i32
  }
  func.func @transform_1(%arg0: i32, %arg1: i32) -> (i32, i32) {
    %c0_i32 = arith.constant 0 : i32
    %c0_i32_0 = arith.constant 0 : i32
    return %arg0, %c0_i32 : i32, i32
  }
  func.func @transform_2(%arg0: i32, %arg1: i32) -> (i32, i32) {
    %c0_i32 = arith.constant 0 : i32
    %c0_i32_0 = arith.constant 0 : i32
    %c0_i32_1 = arith.constant 0 : i32
    return %c0_i32, %c0_i32_0 : i32, i32
  }
  func.func @transform_3(%arg0: i32, %arg1: i32) -> (i32, i32) {
    %c0_i32 = arith.constant 0 : i32
    %c0_i32_0 = arith.constant 0 : i32
    return %c0_i32, %arg1 : i32, i32
  }
  func.func @transform_4(%arg0: i32, %arg1: i32) -> (i32, i32) {
    %c0_i32 = arith.constant 0 : i32
    return %arg0, %arg1 : i32, i32
  }
}

</mosaic_0001>

<llo_original>
// kernel: tpu_custom_call.1
$region0: #{tpu_custom_call.1}
  #allocation0 [shape = 'u32[]', space=smem, size = 0x4, offset = 0x4, fixed_abs, tag = 'smem constant byte address 0x4 - core index']
  #allocation1 [shape = 'u32[72,128]{1,0:T(1,128)}', space=vmem, size = 0x9000, scoped, tag = 'internal scratch']
  #allocation2 [shape = 'f32[8,8]{1,0:T(8,128)}', space=vmem, size = 0x1000, scoped, tag = 'scratch operand']
  #allocation3 [shape = 'f32[1]{0:T(128)S(6)}', space=smem, size = 0x200, scoped, tag = 'scoped memory for tpu_custom_call.1']
  %s0 = inlined_call_operand.<no memory space> [shape: f32[1], index: 0, kind: input, shape index: {}]
  %s1 = inlined_call_operand.vmem [shape: f32[8,32], index: 1, kind: input, shape index: {}]
  %s2 = inlined_call_operand.vmem [shape: f32[32,8], index: 2, kind: input, shape index: {}]
  %s3 = inlined_call_operand.vmem [shape: f32[8,128], index: 3, kind: input, shape index: {}]
  %s4 = inlined_call_operand.hbm [shape: f32[8,128], index: 4, kind: output, shape index: {}]
  %s5 = sld [smem:[#allocation0]]
  $region30: #{tpu_custom_call.1} parent=0
    _
  %s7 = ssub.s32 1, %s5
  %s8 = scalar_select 0, %s7, %s5
  %9 = sst [smem:[#allocation3]] %s0
  $region1: #{tpu_custom_call.1} parent=0
    #allocation4 [shape = 'u8[4096]{0}', space=vmem, size = 0x1000, scoped, tag = 'output window, operand 0, single buffered']
    #allocation5 [shape = 's32[1]{0}', space=sflag, size = 0x4, scoped, tag = 'scoped memory for tpu_custom_call.1']
    %10 = vsyncpa [#allocation5], 0
    // Predicated region
    $region2: #{tpu_custom_call.1} parent=1 // pred_check
      _
    $region3: #{tpu_custom_call.1} parent=1 // pred_check_branch
      %12 = sbr.rel (0) target = $region5
    $region4: #{tpu_custom_call.1} parent=1 // pred_region
      _
    $region5: #{tpu_custom_call.1} parent=1 // pred_fallthru
      _
    // Predicated region
    $region6: #{tpu_custom_call.1} parent=1 // pred_check
      _
    $region7: #{tpu_custom_call.1} parent=1 // pred_check_branch
      %14 = sbr.rel (0) target = $region9
    $region8: #{tpu_custom_call.1} parent=1 // pred_region
      _
    $region9: #{tpu_custom_call.1} parent=1 // pred_fallthru
      _
    // Predicated region
    $region10: #{tpu_custom_call.1} parent=1 // pred_check
      _
    $region11: #{tpu_custom_call.1} parent=1 // pred_check_branch
      %16 = sbr.rel (0) target = $region13
    $region12: #{tpu_custom_call.1} parent=1 // pred_region
      _
    $region13: #{tpu_custom_call.1} parent=1 // pred_fallthru
      _
    // Predicated region
    $region14: #{tpu_custom_call.1} parent=1 // pred_check
      _
    $region15: #{tpu_custom_call.1} parent=1 // pred_check_branch
      %18 = sbr.rel (0) target = $region17
    $region16: #{tpu_custom_call.1} parent=1 // pred_region
      _
    $region17: #{tpu_custom_call.1} parent=1 // pred_fallthru
      _
    %p19 = scmp.eq.s32.totalorder 0, 0
    // Predicated region
    $region18: #{tpu_custom_call.1} parent=1 // pred_check
      %p20 = pneg %p19
    $region19: #{tpu_custom_call.1} parent=1 // pred_check_branch
      %22 = sbr.rel (%p20) target = $region21
    $region20: #{tpu_custom_call.1} parent=1 // pred_region
      %v23 = vld [vmem:[%s1] sm:$0xff]
      %v24 = vld [vmem:[%s2] sm:$0xff]
      %v25 = vld [vmem:[%s2 + $0x8] sm:$0xff]
      %v26 = vld [vmem:[%s2 + $0x10] sm:$0xff]
      %v27 = vld [vmem:[%s2 + $0x18] sm:$0xff]
      %vm28 = vcmask 261120
      %v30 = vsel %vm28, %v23, 0
      %32 = vmatpush.msra.mxu0 0.0
      %33 = vmatpush.msra.mxu0 0.0
      %34 = vmatpush.msra.mxu0 0.0
      %35 = vmatpush.msra.mxu0 0.0
      %36 = vmatpush.msra.mxu0 0.0
      %37 = vmatpush.msra.mxu0 0.0
      %38 = vmatpush.msra.mxu0 0.0
      %39 = vmatpush.msra.mxu0 0.0
      %40 = vmatpush.msra.mxu0 0.0
      %41 = vmatpush.msra.mxu0 0.0
      %42 = vmatpush.msra.mxu0 0.0
      %43 = vmatpush.msra.mxu0 0.0
      %44 = vmatpush.msra.mxu0 %v27
      %45 = vmatpush.msra.mxu0 %v26
      %46 = vmatpush.msra.mxu0 %v25
      %47 = vmatpush.msra.mxu0 %v24
      %48 = vmatmul.f32.gmra.mxu0 %v30
      %v49 = vpop.f32.mrf.mxu0
      %v50 = vadd.f32 0.0, %v49
      %51 = vdwg.mxu0
      %s52 = sld [smem:[#allocation3]]
      %v53 = vstv %s52
      %v54 = vmul.f32 %v53, %v50
      %vm55 = vcmask 64512
      %56 = vst.msk [vmem:[#allocation2] sm:$0xff] %vm55, %v54
    $region21: #{tpu_custom_call.1} parent=1 // pred_fallthru
      _
    %v57 = vld [vmem:[#allocation2] sm:$0xff]
    %v58 = vld [vmem:[%s3] sm:$0xff]
    %vm59 = vcmask 64512
    %v61 = vsel %vm59, %v57, 0
    %63 = vmatpush.msra.mxu0 0.0
    %64 = vmatpush.msra.mxu0 0.0
    %65 = vmatpush.msra.mxu0 0.0
    %66 = vmatpush.msra.mxu0 0.0
    %67 = vmatpush.msra.mxu0 0.0
    %68 = vmatpush.msra.mxu0 0.0
    %69 = vmatpush.msra.mxu0 0.0
    %70 = vmatpush.msra.mxu0 0.0
    %71 = vmatpush.msra.mxu0 0.0
    %72 = vmatpush.msra.mxu0 0.0
    %73 = vmatpush.msra.mxu0 0.0
    %74 = vmatpush.msra.mxu0 0.0
    %75 = vmatpush.msra.mxu0 0.0
    %76 = vmatpush.msra.mxu0 0.0
    %77 = vmatpush.msra.mxu0 0.0
    %78 = vmatpush.msra.mxu0 %v58
    %79 = vmatmul.f32.gmra.mxu0 %v61
    %v80 = vpop.f32.mrf.mxu0
    %v81 = vadd.f32 0.0, %v80
    %82 = vdwg.mxu0
    %83 = vst [vmem:[#allocation4] sm:$0xff] %v81
    // Predicated region
    $region22: #{tpu_custom_call.1} parent=1 // pred_check
      _
    $region23: #{tpu_custom_call.1} parent=1 // pred_check_branch
      %85 = sbr.rel (0) target = $region25
    $region24: #{tpu_custom_call.1} parent=1 // pred_region
      %87 = vsyncadd [#allocation5], 0
      %s89 = sshll.u32 [#allocation4], 4
      %s90 = int_to_ptr.vmem [resolvable:$true] %s89
      %s91 = sshll.u32 %s4, 4
      %s92 = int_to_ptr.hbm [resolvable:$true] %s91
      %94 = dma.vmem_to_hbm [thread:$0]  %s90, 128, %s92, [#allocation5]
    $region25: #{tpu_custom_call.1} parent=1 // pred_fallthru
      _
    // Predicated region
    $region26: #{tpu_custom_call.1} parent=1 // pred_check
      _
    $region27: #{tpu_custom_call.1} parent=1 // pred_check_branch
      %96 = sbr.rel (0) target = $region29
    $region28: #{tpu_custom_call.1} parent=1 // pred_region
      %98 = dma.done [#allocation5], 128
    $region29: #{tpu_custom_call.1} parent=1 // pred_fallthru
      _
    %99 = vsyncpa [#allocation5], 1

</llo_original>
